<compile_context>
chip_gen: v6e
topology: v6e:2x2x1
jax: 0.10.0
libtpu: 0.0.40
codegen_flags: <defaults>
</compile_context>

<pallas_src>
import functools

import jax
import jax.numpy as jnp
from jax import lax
from jax.experimental import pallas as pl
from jax.experimental.pallas import tpu as pltpu


LANE = 128  # TPU lane width: output class dim is padded to this.


def _round_up(x, m):
    return (x + m - 1) // m * m


def mlp_kernel(x_ref, w1_ref, b1_ref, w2_ref, b2_ref, w3_ref, b3_ref, o_ref,
               *, num_classes):
    """sigmoid(xW1+b1) -> sigmoid(.W2+b2) -> .W3+b3 -> log_softmax (lane-padded)."""
    x = x_ref[...]  # bf16 (TB, D)

    # hidden layer 1: MXU matmul (bf16 in, f32 acc) + EUP exp + EUP reciprocal
    h = jnp.dot(x, w1_ref[...], preferred_element_type=jnp.float32) + b1_ref[...]
    h = pl.reciprocal(1.0 + jnp.exp(-h), approx=True)          # sigmoid

    # hidden layer 2
    h = jnp.dot(h.astype(jnp.bfloat16), w2_ref[...],
                preferred_element_type=jnp.float32) + b2_ref[...]
    h = pl.reciprocal(1.0 + jnp.exp(-h), approx=True)          # sigmoid

    # output projection into a lane-dense (TB, 128) block
    logits = jnp.dot(h.astype(jnp.bfloat16), w3_ref[...],
                     preferred_element_type=jnp.float32) + b3_ref[...]

    # mask the padded class lanes out of the softmax reduction
    lane_ids = lax.broadcasted_iota(jnp.int32, logits.shape, dimension=1)
    logits = jnp.where(lane_ids < num_classes, logits, jnp.float32(-1e30))

    # numerically stable log_softmax over dim=1 (kept exact, in f32)
    m = jnp.max(logits, axis=-1, keepdims=True)
    shifted = logits - m
    lse = jnp.log(jnp.sum(jnp.exp(shifted), axis=-1, keepdims=True))
    o_ref[...] = shifted - lse


def mlp_forward(x, w1, b1, w2, b2, w3, b3):
    """Flatten input and run the fused, batch-tiled Pallas kernel.

    x: (B, ...) -> flattened to (B, D) like torch's x.view(B, -1).
    Weights are (in, out); biases are (1, out). Returns (B, C) f32 log-probs.
    """
    B = x.shape[0]
    x2 = x.reshape(B, -1).astype(jnp.float32)
    D = x2.shape[1]
    C = w3.shape[1]

    # Batch tiling: TB rows per grid step (sublane-aligned). Pad B if needed.
    TB = min(128, _round_up(B, 8))
    B_pad = _round_up(B, TB)
    if B_pad != B:
        x2 = jnp.pad(x2, ((0, B_pad - B), (0, 0)))

    # Lane-dense output: pad the class dim of W3 / b3 to 128 (zeros; padded
    # logits are masked to -1e30 inside the kernel before the softmax).
    C_pad = _round_up(C, LANE)
    w3p = jnp.pad(w3, ((0, 0), (0, C_pad - C)))
    b3p = jnp.pad(b3, ((0, 0), (0, C_pad - C)))

    # bf16 matmul inputs (doubles MXU throughput, halves weight DMA bytes);
    # biases and all elementwise math stay f32.
    x_bf = x2.astype(jnp.bfloat16)
    w1b = w1.astype(jnp.bfloat16)
    w2b = w2.astype(jnp.bfloat16)
    w3b = w3p.astype(jnp.bfloat16)
    b1f = b1.astype(jnp.float32)
    b2f = b2.astype(jnp.float32)
    b3f = b3p.astype(jnp.float32)

    # Weights/biases: constant block index across the grid -> DMA'd once,
    # stay VMEM-resident while activation tiles stream through.
    resident = lambda shape: pl.BlockSpec(shape, lambda i: (0, 0))

    # NOTE: at these shapes everything fits comfortably in the default scoped
    # VMEM limit on all generations (v7x 64 MiB physical included); for large
    # hidden dims, re-derive TB and set vmem_limit_bytes here.
    out = pl.pallas_call(
        functools.partial(mlp_kernel, num_classes=C),
        out_shape=jax.ShapeDtypeStruct((B_pad, C_pad), jnp.float32),
        grid=(B_pad // TB,),
        in_specs=[
            pl.BlockSpec((TB, D), lambda i: (i, 0)),   # activations: streamed
            resident(w1b.shape), resident(b1f.shape),
            resident(w2b.shape), resident(b2f.shape),
            resident(w3b.shape), resident(b3f.shape),
        ],
        out_specs=pl.BlockSpec((TB, C_pad), lambda i: (i, 0)),
        compiler_params=pltpu.CompilerParams(
            dimension_semantics=("parallel",),  # megacore sharding on v7x
        ),
    )(x_bf, w1b, b1f, w2b, b2f, w3b, b3f)

    return out[:B, :C]


def make_params(input_size, hidden_size, num_classes, key):
    """Deterministic parameters mirroring MLP.__init__ (hidden_count=2,
    initializer=torch.nn.init.ones_ -> hidden weights all ones; biases and the
    output layer use PyTorch-default-style uniform init from `key`)."""
    h1 = hidden_size // 2          # first hidden layer width
    h2 = h1 // 2                   # second hidden layer width

    k1, k2, k3, k4 = jax.random.split(key, 4)

    def unif(k, shape, fan_in):
        bound = 1.0 / jnp.sqrt(fan_in)
        return jax.random.uniform(k, shape, jnp.float32, -bound, bound)

    w1 = jnp.ones((input_size, h1), jnp.float32)          # (in, out), ones
    b1 = unif(k1, (1, h1), input_size)
    w2 = jnp.ones((h1, h2), jnp.float32)                  # ones
    b2 = unif(k2, (1, h2), h1)
    w3 = unif(k3, (h2, num_classes), h2)                  # default init
    b3 = unif(k4, (1, num_classes), h2)
    return w1, b1, w2, b2, w3, b3


if __name__ == "__main__":
    # Small shapes: batch=2, input is a 4x4 "image" -> D=16, hidden_size=32
    # (-> hidden widths 16 and 8), num_classes=10.
    B, D_SIDE, HIDDEN, CLASSES = 2, 4, 32, 10
    input_size = D_SIDE * D_SIDE

    key = jax.random.PRNGKey(0)
    kx, kp = jax.random.split(key)
    x = jax.random.normal(kx, (B, D_SIDE, D_SIDE), jnp.float32)

    params = make_params(input_size, HIDDEN, CLASSES, kp)

    out = mlp_forward(x, *params)
    out = jax.block_until_ready(out)

    # sanity: log_softmax rows sum (in prob space) to ~1, shape is (B, C)
    assert out.shape == (B, CLASSES)
    assert jnp.allclose(jnp.sum(jnp.exp(out), axis=1), 1.0, atol=1e-5)

    print("KERNEL_OK")
</pallas_src>

<mosaic_0001>
module attributes {stable_mosaic.version = 11 : i64} {
  func.func @mlp_kernel(%arg0: i32, %arg1: memref<8x16xbf16, #tpu.memory_space<vmem>>, %arg2: memref<16x16xbf16, #tpu.memory_space<vmem>>, %arg3: memref<1x16xf32, #tpu.memory_space<vmem>>, %arg4: memref<16x8xbf16, #tpu.memory_space<vmem>>, %arg5: memref<1x8xf32, #tpu.memory_space<vmem>>, %arg6: memref<8x128xbf16, #tpu.memory_space<vmem>>, %arg7: memref<1x128xf32, #tpu.memory_space<vmem>>, %arg8: memref<8x128xf32, #tpu.memory_space<vmem>>) attributes {dimension_semantics = [#tpu.dimension_semantics<parallel>], iteration_bounds = array<i64: 1>, scalar_prefetch = 0 : i64, scratch_operands = 0 : i64, tpu.core_type = #tpu.core_type<tc>, window_params = [{transform_indices = @transform_0, window_bounds = array<i64: 8, 16>}, {pipeline_mode = #tpu.pipeline_mode<synchronous>, transform_indices = @transform_1, window_bounds = array<i64: 16, 16>}, {pipeline_mode = #tpu.pipeline_mode<synchronous>, transform_indices = @transform_2, window_bounds = array<i64: 1, 16>}, {pipeline_mode = #tpu.pipeline_mode<synchronous>, transform_indices = @transform_3, window_bounds = array<i64: 16, 8>}, {pipeline_mode = #tpu.pipeline_mode<synchronous>, transform_indices = @transform_4, window_bounds = array<i64: 1, 8>}, {pipeline_mode = #tpu.pipeline_mode<synchronous>, transform_indices = @transform_5, window_bounds = array<i64: 8, 128>}, {pipeline_mode = #tpu.pipeline_mode<synchronous>, transform_indices = @transform_6, window_bounds = array<i64: 1, 128>}, {transform_indices = @transform_7, window_bounds = array<i64: 8, 128>}]} {
    %c0 = arith.constant 0 : index
    %c0_0 = arith.constant 0 : index
    %0 = vector.load %arg1[%c0, %c0_0] : memref<8x16xbf16, #tpu.memory_space<vmem>>, vector<8x16xbf16>
    %c0_1 = arith.constant 0 : index
    %c0_2 = arith.constant 0 : index
    %1 = vector.load %arg2[%c0_1, %c0_2] : memref<16x16xbf16, #tpu.memory_space<vmem>>, vector<16x16xbf16>
    %cst = arith.constant dense<0.000000e+00> : vector<8x16xf32>
    %2 = tpu.matmul %0, %1, %cst {dimension_numbers = #tpu.dot_dimension_numbers<[1], [0], [0], [1], [0, 0, 1, 1], [], []>} : vector<8x16xbf16>, vector<16x16xbf16>, vector<8x16xf32> -> vector<8x16xf32>
    %c0_3 = arith.constant 0 : index
    %c0_4 = arith.constant 0 : index
    %3 = vector.load %arg3[%c0_3, %c0_4] : memref<1x16xf32, #tpu.memory_space<vmem>>, vector<1x16xf32>
    %4 = vector.broadcast %3 : vector<1x16xf32> to vector<8x16xf32>
    %5 = arith.addf %2, %4 : vector<8x16xf32>
    %cst_5 = arith.constant 0.000000e+00 : f32
    %6 = vector.broadcast %cst_5 : f32 to vector<8x16xf32>
    %7 = arith.subf %6, %5 : vector<8x16xf32>
    %8 = math.exp %7 : vector<8x16xf32>
    %cst_6 = arith.constant 1.000000e+00 : f32
    %9 = vector.broadcast %cst_6 : f32 to vector<8x16xf32>
    %10 = arith.addf %9, %8 : vector<8x16xf32>
    %11 = tpu.reciprocal %10 {approx = true} : vector<8x16xf32> -> vector<8x16xf32>
    %12 = arith.truncf %11 : vector<8x16xf32> to vector<8x16xbf16>
    %c0_7 = arith.constant 0 : index
    %c0_8 = arith.constant 0 : index
    %13 = vector.load %arg4[%c0_7, %c0_8] : memref<16x8xbf16, #tpu.memory_space<vmem>>, vector<16x8xbf16>
    %cst_9 = arith.constant dense<0.000000e+00> : vector<8x8xf32>
    %14 = tpu.matmul %12, %13, %cst_9 {dimension_numbers = #tpu.dot_dimension_numbers<[1], [0], [0], [1], [0, 0, 1, 1], [], []>} : vector<8x16xbf16>, vector<16x8xbf16>, vector<8x8xf32> -> vector<8x8xf32>
    %c0_10 = arith.constant 0 : index
    %c0_11 = arith.constant 0 : index
    %15 = vector.load %arg5[%c0_10, %c0_11] : memref<1x8xf32, #tpu.memory_space<vmem>>, vector<1x8xf32>
    %16 = vector.broadcast %15 : vector<1x8xf32> to vector<8x8xf32>
    %17 = arith.addf %14, %16 : vector<8x8xf32>
    %cst_12 = arith.constant 0.000000e+00 : f32
    %18 = vector.broadcast %cst_12 : f32 to vector<8x8xf32>
    %19 = arith.subf %18, %17 : vector<8x8xf32>
    %20 = math.exp %19 : vector<8x8xf32>
    %cst_13 = arith.constant 1.000000e+00 : f32
    %21 = vector.broadcast %cst_13 : f32 to vector<8x8xf32>
    %22 = arith.addf %21, %20 : vector<8x8xf32>
    %23 = tpu.reciprocal %22 {approx = true} : vector<8x8xf32> -> vector<8x8xf32>
    %24 = arith.truncf %23 : vector<8x8xf32> to vector<8x8xbf16>
    %c0_14 = arith.constant 0 : index
    %c0_15 = arith.constant 0 : index
    %25 = vector.load %arg6[%c0_14, %c0_15] : memref<8x128xbf16, #tpu.memory_space<vmem>>, vector<8x128xbf16>
    %cst_16 = arith.constant dense<0.000000e+00> : vector<8x128xf32>
    %26 = tpu.matmul %24, %25, %cst_16 {dimension_numbers = #tpu.dot_dimension_numbers<[1], [0], [0], [1], [0, 0, 1, 1], [], []>} : vector<8x8xbf16>, vector<8x128xbf16>, vector<8x128xf32> -> vector<8x128xf32>
    %c0_17 = arith.constant 0 : index
    %c0_18 = arith.constant 0 : index
    %27 = vector.load %arg7[%c0_17, %c0_18] : memref<1x128xf32, #tpu.memory_space<vmem>>, vector<1x128xf32>
    %28 = vector.broadcast %27 : vector<1x128xf32> to vector<8x128xf32>
    %29 = arith.addf %26, %28 : vector<8x128xf32>
    %30 = tpu.iota {dimensions = array<i32: 1>} : vector<8x128xi32>
    %c10_i32 = arith.constant 10 : i32
    %31 = vector.broadcast %c10_i32 : i32 to vector<8x128xi32>
    %32 = arith.cmpi slt, %30, %31 : vector<8x128xi32>
    %cst_19 = arith.constant -1.000000e+30 : f32
    %33 = vector.broadcast %cst_19 : f32 to vector<8x128xf32>
    %34 = arith.select %32, %29, %33 : vector<8x128xi1>, vector<8x128xf32>
    %cst_20 = arith.constant dense<0xFF800000> : vector<8xf32>
    %35 = vector.multi_reduction <maximumf>, %34, %cst_20 [1] : vector<8x128xf32> to vector<8xf32>
    %36 = vector.shape_cast %35 : vector<8xf32> to vector<8x1xf32>
    %37 = vector.broadcast %36 : vector<8x1xf32> to vector<8x128xf32>
    %38 = arith.subf %34, %37 : vector<8x128xf32>
    %39 = math.exp %38 : vector<8x128xf32>
    %cst_21 = arith.constant dense<0.000000e+00> : vector<8xf32>
    %40 = vector.multi_reduction <add>, %39, %cst_21 [1] : vector<8x128xf32> to vector<8xf32>
    %41 = vector.shape_cast %40 : vector<8xf32> to vector<8x1xf32>
    %42 = math.log %41 : vector<8x1xf32>
    %43 = vector.broadcast %42 : vector<8x1xf32> to vector<8x128xf32>
    %44 = arith.subf %38, %43 : vector<8x128xf32>
    %c0_22 = arith.constant 0 : index
    %c0_23 = arith.constant 0 : index
    %45 = vector.load %arg8[%c0_22, %c0_23] : memref<8x128xf32, #tpu.memory_space<vmem>>, vector<8x128xf32>
    tpu.vector_store %arg8[%c0_22, %c0_23], %44 {strides = array<i32>} : memref<8x128xf32, #tpu.memory_space<vmem>>, vector<8x128xf32>,
    return
  }
  func.func @transform_0(%arg0: i32) -> (i32, i32) {
    %c0_i32 = arith.constant 0 : i32
    %c0_i32_0 = arith.constant 0 : i32
    return %arg0, %c0_i32 : i32, i32
  }
  func.func @transform_1(%arg0: i32) -> (i32, i32) {
    %c0_i32 = arith.constant 0 : i32
    %c0_i32_0 = arith.constant 0 : i32
    %c0_i32_1 = arith.constant 0 : i32
    return %c0_i32, %c0_i32_0 : i32, i32
  }
  func.func @transform_2(%arg0: i32) -> (i32, i32) {
    %c0_i32 = arith.constant 0 : i32
    %c0_i32_0 = arith.constant 0 : i32
    %c0_i32_1 = arith.constant 0 : i32
    return %c0_i32, %c0_i32_0 : i32, i32
  }
  func.func @transform_3(%arg0: i32) -> (i32, i32) {
    %c0_i32 = arith.constant 0 : i32
    %c0_i32_0 = arith.constant 0 : i32
    %c0_i32_1 = arith.constant 0 : i32
    return %c0_i32, %c0_i32_0 : i32, i32
  }
  func.func @transform_4(%arg0: i32) -> (i32, i32) {
    %c0_i32 = arith.constant 0 : i32
    %c0_i32_0 = arith.constant 0 : i32
    %c0_i32_1 = arith.constant 0 : i32
    return %c0_i32, %c0_i32_0 : i32, i32
  }
  func.func @transform_5(%arg0: i32) -> (i32, i32) {
    %c0_i32 = arith.constant 0 : i32
    %c0_i32_0 = arith.constant 0 : i32
    %c0_i32_1 = arith.constant 0 : i32
    return %c0_i32, %c0_i32_0 : i32, i32
  }
  func.func @transform_6(%arg0: i32) -> (i32, i32) {
    %c0_i32 = arith.constant 0 : i32
    %c0_i32_0 = arith.constant 0 : i32
    %c0_i32_1 = arith.constant 0 : i32
    return %c0_i32, %c0_i32_0 : i32, i32
  }
  func.func @transform_7(%arg0: i32) -> (i32, i32) {
    %c0_i32 = arith.constant 0 : i32
    %c0_i32_0 = arith.constant 0 : i32
    return %arg0, %c0_i32 : i32, i32
  }
}

</mosaic_0001>

<llo_original>
// kernel: tpu_custom_call.1
$region0: #{tpu_custom_call.1}
  #allocation0 [shape = 'u32[]', space=smem, size = 0x4, offset = 0x4, fixed_abs, tag = 'smem constant byte address 0x4 - core index']
  #allocation1 [shape = 'u32[144,128]{1,0:T(1,128)}', space=vmem, size = 0x12000, scoped, tag = 'internal scratch']
  %s0 = inlined_call_operand.vmem [shape: bf16[8,16], index: 0, kind: input, shape index: {}]
  %s1 = inlined_call_operand.vmem [shape: bf16[16,16], index: 1, kind: input, shape index: {}]
  %s2 = inlined_call_operand.vmem [shape: f32[1,16], index: 2, kind: input, shape index: {}]
  %s3 = inlined_call_operand.vmem [shape: bf16[16,8], index: 3, kind: input, shape index: {}]
  %s4 = inlined_call_operand.hbm [shape: f32[1,8], index: 4, kind: input, shape index: {}]
  %s5 = inlined_call_operand.vmem [shape: bf16[8,128], index: 5, kind: input, shape index: {}]
  %s6 = inlined_call_operand.vmem [shape: f32[1,128], index: 6, kind: input, shape index: {}]
  %s7 = inlined_call_operand.hbm [shape: f32[8,128], index: 7, kind: output, shape index: {}]
  %s8 = sld [smem:[#allocation0]]
  $region42: #{tpu_custom_call.1} parent=0
    _
  %s10 = ssub.s32 1, %s8
  %s11 = scalar_select 0, %s10, %s8
  $region1: #{tpu_custom_call.1} parent=0
    #allocation2 [shape = 'u8[512]{0}', space=vmem, size = 0x400, scoped, tag = 'input window, operand 4, single buffered']
    #allocation3 [shape = 's32[1]{0}', space=sflag, size = 0x4, scoped, tag = 'scoped memory for tpu_custom_call.1']
    #allocation4 [shape = 's32[1]{0}', space=sflag, size = 0x4, scoped, tag = 'scoped memory for tpu_custom_call.1']
    #allocation5 [shape = 'u8[4096]{0}', space=vmem, size = 0x1000, scoped, tag = 'output window, operand 0, single buffered']
    %12 = vsyncpa [#allocation3], 0
    %13 = vsyncpa [#allocation4], 0
    // Predicated region
    $region2: #{tpu_custom_call.1} parent=1 // pred_check
      _
    $region3: #{tpu_custom_call.1} parent=1 // pred_check_branch
      %15 = sbr.rel (0) target = $region5
    $region4: #{tpu_custom_call.1} parent=1 // pred_region
      _
    $region5: #{tpu_custom_call.1} parent=1 // pred_fallthru
      _
    // Predicated region
    $region6: #{tpu_custom_call.1} parent=1 // pred_check
      _
    $region7: #{tpu_custom_call.1} parent=1 // pred_check_branch
      %17 = sbr.rel (0) target = $region9
    $region8: #{tpu_custom_call.1} parent=1 // pred_region
      _
    $region9: #{tpu_custom_call.1} parent=1 // pred_fallthru
      _
    // Predicated region
    $region10: #{tpu_custom_call.1} parent=1 // pred_check
      _
    $region11: #{tpu_custom_call.1} parent=1 // pred_check_branch
      %19 = sbr.rel (0) target = $region13
    $region12: #{tpu_custom_call.1} parent=1 // pred_region
      _
    $region13: #{tpu_custom_call.1} parent=1 // pred_fallthru
      _
    // Predicated region
    $region14: #{tpu_custom_call.1} parent=1 // pred_check
      _
    $region15: #{tpu_custom_call.1} parent=1 // pred_check_branch
      %21 = sbr.rel (0) target = $region17
    $region16: #{tpu_custom_call.1} parent=1 // pred_region
      _
    $region17: #{tpu_custom_call.1} parent=1 // pred_fallthru
      _
    // Predicated region
    $region18: #{tpu_custom_call.1} parent=1 // pred_check
      _
    $region19: #{tpu_custom_call.1} parent=1 // pred_check_branch
      %23 = sbr.rel (0) target = $region21
    $region20: #{tpu_custom_call.1} parent=1 // pred_region
      %s25 = ssub.s32 16, 16
      %26 = vsyncadd [#allocation3], %s25
      %s28 = sshll.u32 [#allocation2], 4
      %s29 = int_to_ptr.vmem [resolvable:$true] %s28
      %31 = dma.hbm_to_vmem [thread:$0]  %s4, 16, %s29, [#allocation3]
    $region21: #{tpu_custom_call.1} parent=1 // pred_fallthru
      _
    // Predicated region
    $region22: #{tpu_custom_call.1} parent=1 // pred_check
      _
    $region23: #{tpu_custom_call.1} parent=1 // pred_check_branch
      %33 = sbr.rel (0) target = $region25
    $region24: #{tpu_custom_call.1} parent=1 // pred_region
      _
    $region25: #{tpu_custom_call.1} parent=1 // pred_fallthru
      _
    // Predicated region
    $region26: #{tpu_custom_call.1} parent=1 // pred_check
      _
    $region27: #{tpu_custom_call.1} parent=1 // pred_check_branch
      %35 = sbr.rel (0) target = $region29
    $region28: #{tpu_custom_call.1} parent=1 // pred_region
      _
    $region29: #{tpu_custom_call.1} parent=1 // pred_fallthru
      _
    // Predicated region
    $region30: #{tpu_custom_call.1} parent=1 // pred_check
      _
    $region31: #{tpu_custom_call.1} parent=1 // pred_check_branch
      %37 = sbr.rel (0) target = $region33
    $region32: #{tpu_custom_call.1} parent=1 // pred_region
      %38 = dma.done [#allocation3], 16
    $region33: #{tpu_custom_call.1} parent=1 // pred_fallthru
      _
    %v40 = vld [vmem:[%s0] sm:$0xf]
    %v41 = vld [vmem:[%s1] sm:$0xf]
    %v42 = vld [vmem:[%s1 + $0x4] sm:$0xf]
    %v43 = vld [vmem:[%s2] sm:$0x1]
    %v45 = vlaneseq
    %v46 = vshrl.u32 %v45, 7
    %v47 = vsub.s32 0, %v46
    %v48 = vrot.slane %v43, %v47
    %v52 = vunpack.c.l.b16 %v41
    %v53 = vunpack.c.l.b16 %v42
    %v54 = vpack.c.b16 %v53, %v52
    %vm56 = vcmask 130048
    %v58 = vsel %vm56, %v40, 0
    %60 = vmatprep.subr.bf16.mxu0 0
    %61 = vmatpush1.bf16.msra.mxu0 0
    %62 = vmatprep.subr.bf16.mxu0 0
    %63 = vmatpush1.bf16.msra.mxu0 0
    %64 = vmatprep.subr.bf16.mxu0 0
    %65 = vmatpush1.bf16.msra.mxu0 0
    %66 = vmatprep.subr.bf16.mxu0 0
    %67 = vmatpush1.bf16.msra.mxu0 0
    %68 = vmatprep.subr.bf16.mxu0 0
    %69 = vmatpush1.bf16.msra.mxu0 0
    %70 = vmatprep.subr.bf16.mxu0 0
    %71 = vmatpush1.bf16.msra.mxu0 0
    %72 = vmatprep.subr.bf16.mxu0 0
    %73 = vmatpush1.bf16.msra.mxu0 0
    %74 = vmatprep.subr.bf16.mxu0 0
    %75 = vmatpush1.bf16.msra.mxu0 %v54
    %76 = vmatprep.subr.bf16.mxu0 0
    %77 = vmatpush2.bf16.msra.mxu0 0
    %78 = vmatprep.subr.bf16.mxu0 0
    %79 = vmatpush2.bf16.msra.mxu0 0
    %80 = vmatprep.subr.bf16.mxu0 0
    %81 = vmatpush2.bf16.msra.mxu0 0
    %82 = vmatprep.subr.bf16.mxu0 0
    %83 = vmatpush2.bf16.msra.mxu0 0
    %84 = vmatprep.subr.bf16.mxu0 0
    %85 = vmatpush2.bf16.msra.mxu0 0
    %86 = vmatprep.subr.bf16.mxu0 0
    %87 = vmatpush2.bf16.msra.mxu0 0
    %88 = vmatprep.subr.bf16.mxu0 0
    %89 = vmatpush2.bf16.msra.mxu0 0
    %90 = vmatprep.subr.bf16.mxu0 0
    %91 = vmatpush2.bf16.msra.mxu0 0
    %92 = vmatprep.mubr.bf16.mxu0 0
    %93 = vmatmul.mubr.bf16.gmra.mxu0 %v58
    %v94 = vpop.f32.mrf.mxu0
    %v95 = vadd.f32 %v48, %v94
    %v96 = vpop.f32.mrf.mxu0
    %v97 = vpop.f32.mrf.mxu0
    %v98 = vpop.f32.mrf.mxu0
    %99 = vdwg.mxu0
    %v100 = vsub.f32 0.0, %v95
    %v101 = vmul.f32 %v100, 1.442695
    %v102 = vpow.pop %v101
    %v103 = vadd.f32 %v102, 1.0
    %v104 = vrcp.pop %v103
    %v105 = vpack.c.bf16 %v104, %v104
    %v106 = vld [vmem:[%s3] sm:$0xf]
    %v107 = vld [vmem:[%s3 + $0x4] sm:$0xf]
    %v108 = vld [vmem:[#allocation2] sm:$0x1]
    %v110 = vlaneseq
    %v111 = vshrl.u32 %v110, 7
    %v112 = vsub.s32 0, %v111
    %v113 = vrot.slane %v108, %v112
    %v117 = vunpack.c.l.b16 %v106
    %v118 = vunpack.c.l.b16 %v107
    %v119 = vpack.c.b16 %v118, %v117
    %v122 = vsel %vm56, %v105, 0
    %124 = vmatprep.subr.bf16.mxu0 0
    %125 = vmatpush1.bf16.msra.mxu0 0
    %126 = vmatprep.subr.bf16.mxu0 0
    %127 = vmatpush1.bf16.msra.mxu0 0
    %128 = vmatprep.subr.bf16.mxu0 0
    %129 = vmatpush1.bf16.msra.mxu0 0
    %130 = vmatprep.subr.bf16.mxu0 0
    %131 = vmatpush1.bf16.msra.mxu0 0
    %132 = vmatprep.subr.bf16.mxu0 0
    %133 = vmatpush1.bf16.msra.mxu0 0
    %134 = vmatprep.subr.bf16.mxu0 0
    %135 = vmatpush1.bf16.msra.mxu0 0
    %136 = vmatprep.subr.bf16.mxu0 0
    %137 = vmatpush1.bf16.msra.mxu0 0
    %138 = vmatprep.subr.bf16.mxu0 0
    %139 = vmatpush1.bf16.msra.mxu0 %v119
    %140 = vmatprep.subr.bf16.mxu0 0
    %141 = vmatpush2.bf16.msra.mxu0 0
    %142 = vmatprep.subr.bf16.mxu0 0
    %143 = vmatpush2.bf16.msra.mxu0 0
    %144 = vmatprep.subr.bf16.mxu0 0
    %145 = vmatpush2.bf16.msra.mxu0 0
    %146 = vmatprep.subr.bf16.mxu0 0
    %147 = vmatpush2.bf16.msra.mxu0 0
    %148 = vmatprep.subr.bf16.mxu0 0
    %149 = vmatpush2.bf16.msra.mxu0 0
    %150 = vmatprep.subr.bf16.mxu0 0
    %151 = vmatpush2.bf16.msra.mxu0 0
    %152 = vmatprep.subr.bf16.mxu0 0
    %153 = vmatpush2.bf16.msra.mxu0 0
    %154 = vmatprep.subr.bf16.mxu0 0
    %155 = vmatpush2.bf16.msra.mxu0 0
    %156 = vmatprep.mubr.bf16.mxu0 0
    %157 = vmatmul.mubr.bf16.gmra.mxu0 %v122
    %v158 = vpop.f32.mrf.mxu0
    %v159 = vadd.f32 %v113, %v158
    %v160 = vpop.f32.mrf.mxu0
    %v161 = vpop.f32.mrf.mxu0
    %v162 = vpop.f32.mrf.mxu0
    %163 = vdwg.mxu0
    %v164 = vsub.f32 0.0, %v159
    %v165 = vmul.f32 %v164, 1.442695
    %v166 = vpow.pop %v165
    %v167 = vadd.f32 %v166, 1.0
    %v168 = vrcp.pop %v167
    %v169 = vpack.c.bf16 %v168, %v168
    %v170 = vld [vmem:[%s5] sm:$0xf]
    %v171 = vld [vmem:[%s6] sm:$0x1]
    %v173 = vlaneseq
    %v174 = vshrl.u32 %v173, 7
    %v175 = vsub.s32 0, %v174
    %v176 = vrot.slane %v171, %v175
    %vm178 = vcmask 64512
    %v180 = vsel %vm178, %v169, 0
    %vm182 = vcmask 1043456
    %v184 = vsel %vm182, %v170, 0
    %186 = vmatprep.subr.bf16.mxu0 0
    %187 = vmatpush1.bf16.msra.mxu0 0
    %188 = vmatprep.subr.bf16.mxu0 0
    %189 = vmatpush1.bf16.msra.mxu0 0
    %190 = vmatprep.subr.bf16.mxu0 0
    %191 = vmatpush1.bf16.msra.mxu0 0
    %192 = vmatprep.subr.bf16.mxu0 0
    %193 = vmatpush1.bf16.msra.mxu0 0
    %194 = vmatprep.subr.bf16.mxu0 0
    %195 = vmatpush1.bf16.msra.mxu0 0
    %196 = vmatprep.subr.bf16.mxu0 0
    %197 = vmatpush1.bf16.msra.mxu0 0
    %198 = vmatprep.subr.bf16.mxu0 0
    %199 = vmatpush1.bf16.msra.mxu0 0
    %200 = vmatprep.subr.bf16.mxu0 0
    %201 = vmatpush1.bf16.msra.mxu0 %v184
    %202 = vmatprep.subr.bf16.mxu0 0
    %203 = vmatpush2.bf16.msra.mxu0 0
    %204 = vmatprep.subr.bf16.mxu0 0
    %205 = vmatpush2.bf16.msra.mxu0 0
    %206 = vmatprep.subr.bf16.mxu0 0
    %207 = vmatpush2.bf16.msra.mxu0 0
    %208 = vmatprep.subr.bf16.mxu0 0
    %209 = vmatpush2.bf16.msra.mxu0 0
    %210 = vmatprep.subr.bf16.mxu0 0
    %211 = vmatpush2.bf16.msra.mxu0 0
    %212 = vmatprep.subr.bf16.mxu0 0
    %213 = vmatpush2.bf16.msra.mxu0 0
    %214 = vmatprep.subr.bf16.mxu0 0
    %215 = vmatpush2.bf16.msra.mxu0 0
    %216 = vmatprep.subr.bf16.mxu0 0
    %217 = vmatpush2.bf16.msra.mxu0 0
    %218 = vmatprep.mubr.bf16.mxu0 0
    %219 = vmatmul.mubr.bf16.gmra.mxu0 %v180
    %v220 = vpop.f32.mrf.mxu0
    %v221 = vadd.f32 %v176, %v220
    %v222 = vpop.f32.mrf.mxu0
    %v223 = vpop.f32.mrf.mxu0
    %v224 = vpop.f32.mrf.mxu0
    %225 = vdwg.mxu0
    %v226 = vlaneseq
    %v227 = vand.u32 %v226, 127
    %vm228 = vcmp.lt.s32.totalorder %v227, 10
    %v229 = vsel %vm228, %v221, -1e+30
    %230 = vmax.xlane.f32.xlu0 %v229
    %v231 = vpop.xlane.xlu0 %230
    %v232 = vsub.f32 %v229, %v231
    %v233 = vmul.f32 %v232, 1.442695
    %v234 = vpow.pop %v233
    %235 = vadd.xlane.f32.xlu0 %v234
    %v236 = vpop.xlane.xlu0 %235
    %v237 = vlog2.pop %v236
    %v238 = vmul.f32 %v237, 0.6931472
    %v239 = vsub.f32 %v232, %v238
    %240 = vst [vmem:[#allocation5] sm:$0xff] %v239
    // Predicated region
    $region34: #{tpu_custom_call.1} parent=1 // pred_check
      _
    $region35: #{tpu_custom_call.1} parent=1 // pred_check_branch
      %242 = sbr.rel (0) target = $region37
    $region36: #{tpu_custom_call.1} parent=1 // pred_region
      %s244 = ssub.s32 128, 128
      %245 = vsyncadd [#allocation4], %s244
      %s247 = sshll.u32 [#allocation5], 4
      %s248 = int_to_ptr.vmem [resolvable:$true] %s247
      %250 = dma.vmem_to_hbm [thread:$0]  %s248, 128, %s7, [#allocation4]
    $region37: #{tpu_custom_call.1} parent=1 // pred_fallthru
      _
    // Predicated region
    $region38: #{tpu_custom_call.1} parent=1 // pred_check
      _
    $region39: #{tpu_custom_call.1} parent=1 // pred_check_branch
      %252 = sbr.rel (0) target = $region41
    $region40: #{tpu_custom_call.1} parent=1 // pred_region
      %253 = dma.done [#allocation4], 128
    $region41: #{tpu_custom_call.1} parent=1 // pred_fallthru
      _
    %254 = vsyncpa [#allocation3], 1
    %255 = vsyncpa [#allocation4], 1

</llo_original>
